<compile_context>
chip_gen: v5e
topology: v5e:2x2
jax: 0.10.0
libtpu: 0.0.40
codegen_flags: <defaults>
</compile_context>

<pallas_src>
import functools

import jax
import jax.numpy as jnp
from jax.experimental import pallas as pl
from jax.experimental.pallas import tpu as pltpu


def _round_up(x, m):
    return ((x + m - 1) // m) * m


def _build_fourier_transform(fd, ns):
    """Combined, transposed fourier2poly transform of shape (2*ns, 2*(2*fd+1)).

    rows [0, ns)    @ coeffs -> x samples
    rows [ns, 2*ns) @ coeffs -> y samples
    coefficient layout along the last axis: [real (2fd+1) | imag (2fd+1)].
    """
    k_vec = jnp.arange(-fd, fd + 1, dtype=jnp.float32)[:, None]   # (2fd+1, 1)
    i_vec = jnp.arange(0, ns, dtype=jnp.float32)[None, :]         # (1, ns)
    t = (2.0 * jnp.pi / ns) * (k_vec @ i_vec)                     # (2fd+1, ns)
    cos_t = jnp.cos(t).T                                          # (ns, 2fd+1)
    sin_t = jnp.sin(t).T
    top = jnp.concatenate([cos_t, -sin_t], axis=1)                # -> x
    bot = jnp.concatenate([sin_t, cos_t], axis=1)                 # -> y
    return jnp.concatenate([top, bot], axis=0).astype(jnp.float32)  # (2*ns, C)


def _pick_tile(m_rows, c, ns, tm_req):
    """Per-generation row-tile size + scoped-VMEM limit.

    f32 bytes per lane: double-buffered (pred+tgt+mask) input blocks, the
    in-kernel f32 copies, the (2*ns, tm) matmul result, smooth-L1 temp and
    the double-buffered (1, tm) output partial.
    """
    bytes_per_lane = 4 * (2 * (2 * c + 1) + (2 * c + 1) + 4 * ns + 8)
    try:
        kind = jax.devices()[0].device_kind.lower()
    except Exception:  # pragma: no cover - non-TPU fallback
        kind = ""
    if "v6" in kind:            # 128 MiB VMEM, 1 TC, ~1.4 TB/s HBM
        cap, vmem_budget, want_two_tiles = 32768, 64 << 20, False
    elif "7" in kind:           # 64 MiB VMEM/TC, 2 TCs, ~3.2 TB/s HBM
        cap, vmem_budget, want_two_tiles = 32768, 40 << 20, True
    elif "v5" in kind:          # 16 MiB scoped default, ~0.8 TB/s HBM
        cap, vmem_budget, want_two_tiles = 8192, 24 << 20, False
    else:
        cap, vmem_budget, want_two_tiles = 16384, 48 << 20, False

    tm_vmem = max(128, (vmem_budget // bytes_per_lane) // 128 * 128)
    if tm_req is None:
        tm = min(cap, tm_vmem)
    else:
        tm = min(_round_up(int(tm_req), 128), tm_vmem)
    tm = min(tm, _round_up(m_rows, 128))          # small problems: one step
    if want_two_tiles and m_rows > 256:
        # keep >=2 grid steps so the "parallel" axis shards across both TCs
        tm = min(tm, _round_up(-(-m_rows // 2), 128))
    return max(tm, 128), vmem_budget


def _fourier_loss_kernel(pred_ref, tgt_ref, mask_ref, f_ref, out_ref, *, m_rows):
    """One grid step: (C, tm) coefficient tile -> (1, tm) smooth-L1 partial."""
    tm = pred_ref.shape[1]
    i = pl.program_id(0)

    pred = pred_ref[...].astype(jnp.float32)          # (C, tm)
    tgt = tgt_ref[...].astype(jnp.float32)            # (C, tm)
    msk = mask_ref[...].astype(jnp.float32)           # (1, tm)
    f = f_ref[...]                                    # (2*ns, C) f32

    # Ragged-tail mask: OOB lanes of the last block hold garbage (possibly
    # NaN/Inf), so zero them with an iota-derived validity mask — NOT by
    # relying on the (also-garbage) mask block.
    lane = jax.lax.broadcasted_iota(jnp.int32, (1, tm), 1)
    valid = (i * tm + lane) < m_rows

    diff = jnp.where(valid, (pred - tgt) * msk, 0.0)  # (C, tm)        VPU
    d = jnp.dot(f, diff,
                preferred_element_type=jnp.float32,
                precision=jax.lax.Precision.HIGHEST)  # (2*ns, tm)     MXU

    ad = jnp.abs(d)
    per = jnp.where(ad < 1.0, 0.5 * d * d, ad - 0.5)  # smooth-L1, beta=1

    # Lane-dense partial: reduce only over sublanes; cross-lane sum, the /2
    # and the hoisted denominator run in XLA.
    out_ref[...] = jnp.sum(per, axis=0, keepdims=True)[None]   # (1, 1, tm)


def fourier_loss(output, mask, ind, target, *, fd, ns, tm=None):
    n, c, h, w = output.shape
    assert c == 2 * (2 * fd + 1), "output channels must be 2*(2*fd+1)"
    kk = ind.shape[1]
    m_rows = n * kk

    # CenterNet gather done on (N, C, H*W): no full NHWC transpose of the
    # feature map is materialized; dtypes pass through (bf16 halves HBM).
    # TODO(synk): for very large N*K / H*W, fuse this gather into the kernel
    # via scalar-prefetched `ind` + manual DMA from an ANY-space HBM ref.
    feat = output.reshape(n, c, h * w)
    idx = jnp.broadcast_to(ind[:, None, :].astype(jnp.int32), (n, c, kk))
    pred_nck = jnp.take_along_axis(feat, idx, axis=2)            # (N, C, K)

    # Lane-dense (transposed) layouts: rows (N*K) on the lane axis.
    pred_t = pred_nck.transpose(1, 0, 2).reshape(c, m_rows)      # (C, N*K)
    tgt_t = target.reshape(m_rows, c).T                          # (C, N*K)
    mask_t = mask.reshape(1, m_rows)                             # (1, N*K)

    f_comb = _build_fourier_transform(fd, ns)                    # (2*ns, C)

    tile_m, vmem_limit = _pick_tile(m_rows, c, ns, tm)
    num_tiles = pl.cdiv(m_rows, tile_m)          # no jnp.pad copies; ragged
                                                 # tail masked in-kernel

    kernel = functools.partial(_fourier_loss_kernel, m_rows=m_rows)
    partials = pl.pallas_call(
        kernel,
        out_shape=jax.ShapeDtypeStruct((num_tiles, 1, tile_m), jnp.float32),
        grid_spec=pltpu.PrefetchScalarGridSpec(
            num_scalar_prefetch=0,
            grid=(num_tiles,),
            in_specs=[
                pl.BlockSpec((c, tile_m), lambda i: (0, i)),
                pl.BlockSpec((c, tile_m), lambda i: (0, i)),
                pl.BlockSpec((1, tile_m), lambda i: (0, i)),
                pl.BlockSpec((2 * ns, c), lambda i: (0, 0)),
            ],
            out_specs=pl.BlockSpec((1, 1, tile_m), lambda i: (i, 0, 0)),
        ),
        compiler_params=pltpu.CompilerParams(
            dimension_semantics=("parallel",),
            vmem_limit_bytes=vmem_limit),
    )(pred_t, tgt_t, mask_t, f_comb)

    numerator = jnp.sum(partials)                    # loss_x + loss_y (sums)
    # Denominator hoisted out of the kernel: expanded-mask sum = sum(mask)*ns.
    denom = jnp.sum(mask.astype(jnp.float32)) * jnp.float32(ns) + jnp.float32(1e-4)
    return 0.5 * numerator / denom


def _reference(output, mask, ind, target, *, fd, ns):
    """Direct (unfused) JAX port of the PyTorch module, for validation."""
    n, c, h, w = output.shape
    feat = jnp.transpose(output, (0, 2, 3, 1)).reshape(n, h * w, c)
    pred = jnp.take_along_axis(feat, ind[..., None].astype(jnp.int32), axis=1)

    def f2p(coeff):
        coeff = coeff.reshape(-1, 2 * (2 * fd + 1)).astype(jnp.float32)
        real = coeff[:, :2 * fd + 1]
        imag = coeff[:, 2 * fd + 1:]
        k_v = jnp.arange(-fd, fd + 1, dtype=jnp.float32)[:, None]
        i_v = jnp.arange(0, ns, dtype=jnp.float32)[None, :]
        t = 2.0 * jnp.pi / ns * (k_v @ i_v)
        x = real @ jnp.cos(t) - imag @ jnp.sin(t)
        y = real @ jnp.sin(t) + imag @ jnp.cos(t)
        return x, y

    ft_x, ft_y = f2p(target)
    ft_xp, ft_yp = f2p(pred)
    m = mask.reshape(-1, 1).astype(jnp.float32) * jnp.ones_like(ft_x)

    def sl1_sum(a, b):
        d = a - b
        ad = jnp.abs(d)
        return jnp.sum(jnp.where(ad < 1.0, 0.5 * d * d, ad - 0.5))

    loss = (sl1_sum(ft_xp * m, ft_x * m) + sl1_sum(ft_yp * m, ft_y * m)) / 2.0
    return loss / (jnp.sum(m) + 1e-4)


if __name__ == "__main__":
    key = jax.random.PRNGKey(0)
    N, K, H, W = 2, 8, 16, 16
    fd, ns = 2, 24
    C = 2 * (2 * fd + 1)            # 10 channels
    k1, k2, k3, k4 = jax.random.split(key, 4)

    output = jax.random.normal(k1, (N, C, H, W), dtype=jnp.float32)
    ind = jax.random.randint(k2, (N, K), 0, H * W, dtype=jnp.int32)
    target = jax.random.normal(k3, (N, K, C), dtype=jnp.float32)
    mask = (jax.random.uniform(k4, (N, K)) > 0.3).astype(jnp.float32)

    loss = fourier_loss(output, mask, ind, target, fd=fd, ns=ns)
    jax.block_until_ready(loss)

    ref = _reference(output, mask, ind, target, fd=fd, ns=ns)
    assert jnp.allclose(loss, ref, rtol=1e-4, atol=1e-5), (loss, ref)

    print("KERNEL_OK")
</pallas_src>

<mosaic_0001>
module attributes {stable_mosaic.version = 11 : i64} {
  func.func @_fourier_loss_kernel(%arg0: i32, %arg1: memref<10x128xf32, #tpu.memory_space<vmem>>, %arg2: memref<10x128xf32, #tpu.memory_space<vmem>>, %arg3: memref<1x128xf32, #tpu.memory_space<vmem>>, %arg4: memref<48x10xf32, #tpu.memory_space<vmem>>, %arg5: memref<1x1x128xf32, #tpu.memory_space<vmem>>) attributes {dimension_semantics = [#tpu.dimension_semantics<parallel>], iteration_bounds = array<i64: 1>, scalar_prefetch = 0 : i64, scratch_operands = 0 : i64, tpu.core_type = #tpu.core_type<tc>, window_params = [{transform_indices = @transform_0, window_bounds = array<i64: 10, 128>}, {transform_indices = @transform_1, window_bounds = array<i64: 10, 128>}, {transform_indices = @transform_2, window_bounds = array<i64: 1, 128>}, {pipeline_mode = #tpu.pipeline_mode<synchronous>, transform_indices = @transform_3, window_bounds = array<i64: 48, 10>}, {transform_indices = @transform_4, window_bounds = array<i64: 1, 1, 128>}]} {
    %c0 = arith.constant 0 : index
    %c0_0 = arith.constant 0 : index
    %0 = vector.load %arg1[%c0, %c0_0] : memref<10x128xf32, #tpu.memory_space<vmem>>, vector<10x128xf32>
    %c0_1 = arith.constant 0 : index
    %c0_2 = arith.constant 0 : index
    %1 = vector.load %arg2[%c0_1, %c0_2] : memref<10x128xf32, #tpu.memory_space<vmem>>, vector<10x128xf32>
    %c0_3 = arith.constant 0 : index
    %c0_4 = arith.constant 0 : index
    %2 = vector.load %arg3[%c0_3, %c0_4] : memref<1x128xf32, #tpu.memory_space<vmem>>, vector<1x128xf32>
    %c0_5 = arith.constant 0 : index
    %c0_6 = arith.constant 0 : index
    %3 = vector.load %arg4[%c0_5, %c0_6] : memref<48x10xf32, #tpu.memory_space<vmem>>, vector<48x10xf32>
    %4 = tpu.iota {dimensions = array<i32: 1>} : vector<1x128xi32>
    %c128_i32 = arith.constant 128 : i32
    %5 = arith.muli %arg0, %c128_i32 : i32
    %6 = vector.broadcast %5 : i32 to vector<1x128xi32>
    %7 = arith.addi %6, %4 : vector<1x128xi32>
    %c16_i32 = arith.constant 16 : i32
    %8 = vector.broadcast %c16_i32 : i32 to vector<1x128xi32>
    %9 = arith.cmpi slt, %7, %8 : vector<1x128xi32>
    %10 = arith.subf %0, %1 : vector<10x128xf32>
    %11 = vector.broadcast %2 : vector<1x128xf32> to vector<10x128xf32>
    %12 = arith.mulf %10, %11 : vector<10x128xf32>
    %cst = arith.constant 0.000000e+00 : f32
    %13 = vector.shape_cast %9 : vector<1x128xi1> to vector<1x128xi1>
    %14 = vector.broadcast %13 : vector<1x128xi1> to vector<10x128xi1>
    %15 = vector.broadcast %cst : f32 to vector<10x128xf32>
    %16 = arith.select %14, %12, %15 : vector<10x128xi1>, vector<10x128xf32>
    %cst_7 = arith.constant dense<0.000000e+00> : vector<48x128xf32>
    %17 = tpu.matmul %3, %16, %cst_7 {dimension_numbers = #tpu.dot_dimension_numbers<[1], [0], [0], [1], [0, 0, 1, 1], [], []>, precision = #tpu.contract_precision<fp32>} : vector<48x10xf32>, vector<10x128xf32>, vector<48x128xf32> -> vector<48x128xf32>
    %18 = math.absf %17 : vector<48x128xf32>
    %cst_8 = arith.constant 1.000000e+00 : f32
    %19 = vector.broadcast %cst_8 : f32 to vector<48x128xf32>
    %20 = arith.cmpf olt, %18, %19 : vector<48x128xf32>
    %cst_9 = arith.constant 5.000000e-01 : f32
    %21 = vector.broadcast %cst_9 : f32 to vector<48x128xf32>
    %22 = arith.mulf %21, %17 : vector<48x128xf32>
    %23 = arith.mulf %22, %17 : vector<48x128xf32>
    %cst_10 = arith.constant 5.000000e-01 : f32
    %24 = vector.broadcast %cst_10 : f32 to vector<48x128xf32>
    %25 = arith.subf %18, %24 : vector<48x128xf32>
    %26 = arith.select %20, %23, %25 : vector<48x128xi1>, vector<48x128xf32>
    %cst_11 = arith.constant dense<0.000000e+00> : vector<128xf32>
    %27 = vector.multi_reduction <add>, %26, %cst_11 [0] : vector<48x128xf32> to vector<128xf32>
    %28 = vector.shape_cast %27 : vector<128xf32> to vector<1x128xf32>
    %29 = vector.shape_cast %28 : vector<1x128xf32> to vector<1x1x128xf32>
    %c0_12 = arith.constant 0 : index
    %c0_13 = arith.constant 0 : index
    %c0_14 = arith.constant 0 : index
    %30 = vector.load %arg5[%c0_12, %c0_13, %c0_14] : memref<1x1x128xf32, #tpu.memory_space<vmem>>, vector<1x1x128xf32>
    tpu.vector_store %arg5[%c0_12, %c0_13, %c0_14], %29 {strides = array<i32>} : memref<1x1x128xf32, #tpu.memory_space<vmem>>, vector<1x1x128xf32>,
    return
  }
  func.func @transform_0(%arg0: i32) -> (i32, i32) {
    %c0_i32 = arith.constant 0 : i32
    %c0_i32_0 = arith.constant 0 : i32
    return %c0_i32, %arg0 : i32, i32
  }
  func.func @transform_1(%arg0: i32) -> (i32, i32) {
    %c0_i32 = arith.constant 0 : i32
    %c0_i32_0 = arith.constant 0 : i32
    return %c0_i32, %arg0 : i32, i32
  }
  func.func @transform_2(%arg0: i32) -> (i32, i32) {
    %c0_i32 = arith.constant 0 : i32
    %c0_i32_0 = arith.constant 0 : i32
    return %c0_i32, %arg0 : i32, i32
  }
  func.func @transform_3(%arg0: i32) -> (i32, i32) {
    %c0_i32 = arith.constant 0 : i32
    %c0_i32_0 = arith.constant 0 : i32
    %c0_i32_1 = arith.constant 0 : i32
    return %c0_i32, %c0_i32_0 : i32, i32
  }
  func.func @transform_4(%arg0: i32) -> (i32, i32, i32) {
    %c0_i32 = arith.constant 0 : i32
    %c0_i32_0 = arith.constant 0 : i32
    %c0_i32_1 = arith.constant 0 : i32
    return %arg0, %c0_i32, %c0_i32_0 : i32, i32, i32
  }
}

</mosaic_0001>

<llo_original>
// kernel: tpu_custom_call.1
$region0: #{tpu_custom_call.1}
  #allocation0 [shape = 'u32[]', space=smem, size = 0x4, offset = 0x4, fixed_abs, tag = 'smem constant byte address 0x4 - core index']
  #allocation1 [shape = 'u32[72,128]{1,0:T(1,128)}', space=vmem, size = 0x9000, scoped, tag = 'internal scratch']
  %s0 = inlined_call_operand.vmem [shape: f32[10,16], index: 0, kind: input, shape index: {}]
  %s1 = inlined_call_operand.vmem [shape: f32[10,16], index: 1, kind: input, shape index: {}]
  %s2 = inlined_call_operand.vmem [shape: f32[1,16], index: 2, kind: input, shape index: {}]
  %s3 = inlined_call_operand.vmem [shape: f32[48,10], index: 3, kind: input, shape index: {}]
  %s4 = inlined_call_operand.hbm [shape: f32[1,1,128], index: 4, kind: output, shape index: {}]
  %s5 = sld [smem:[#allocation0]]
  $region26: #{tpu_custom_call.1} parent=0
    _
  %s7 = ssub.s32 1, %s5
  %s8 = scalar_select 0, %s7, %s5
  $region1: #{tpu_custom_call.1} parent=0
    #allocation2 [shape = 'u8[512]{0}', space=vmem, size = 0x400, scoped, tag = 'output window, operand 0, single buffered']
    #allocation3 [shape = 's32[1]{0}', space=sflag, size = 0x4, scoped, tag = 'scoped memory for tpu_custom_call.1']
    %9 = vsyncpa [#allocation3], 0
    // Predicated region
    $region2: #{tpu_custom_call.1} parent=1 // pred_check
      _
    $region3: #{tpu_custom_call.1} parent=1 // pred_check_branch
      %11 = sbr.rel (0) target = $region5
    $region4: #{tpu_custom_call.1} parent=1 // pred_region
      _
    $region5: #{tpu_custom_call.1} parent=1 // pred_fallthru
      _
    // Predicated region
    $region6: #{tpu_custom_call.1} parent=1 // pred_check
      _
    $region7: #{tpu_custom_call.1} parent=1 // pred_check_branch
      %13 = sbr.rel (0) target = $region9
    $region8: #{tpu_custom_call.1} parent=1 // pred_region
      _
    $region9: #{tpu_custom_call.1} parent=1 // pred_fallthru
      _
    // Predicated region
    $region10: #{tpu_custom_call.1} parent=1 // pred_check
      _
    $region11: #{tpu_custom_call.1} parent=1 // pred_check_branch
      %15 = sbr.rel (0) target = $region13
    $region12: #{tpu_custom_call.1} parent=1 // pred_region
      _
    $region13: #{tpu_custom_call.1} parent=1 // pred_fallthru
      _
    // Predicated region
    $region14: #{tpu_custom_call.1} parent=1 // pred_check
      _
    $region15: #{tpu_custom_call.1} parent=1 // pred_check_branch
      %17 = sbr.rel (0) target = $region17
    $region16: #{tpu_custom_call.1} parent=1 // pred_region
      _
    $region17: #{tpu_custom_call.1} parent=1 // pred_fallthru
      _
    %v18 = vld [vmem:[%s0] sm:$0xff]
    %v19 = vld [vmem:[%s0 + $0x8] sm:$0x3]
    %v20 = vld [vmem:[%s1] sm:$0xff]
    %v21 = vld [vmem:[%s1 + $0x8] sm:$0x3]
    %v22 = vld [vmem:[%s2] sm:$0x1]
    %v23 = vld [vmem:[%s3] sm:$0xff]
    %v24 = vld [vmem:[%s3 + $0x8] sm:$0xff]
    %v25 = vld [vmem:[%s3 + $0x10] sm:$0xff]
    %v26 = vld [vmem:[%s3 + $0x18] sm:$0xff]
    %v27 = vld [vmem:[%s3 + $0x20] sm:$0xff]
    %v28 = vld [vmem:[%s3 + $0x28] sm:$0xff]
    %v29 = vlaneseq
    %v30 = vand.u32 %v29, 127
    %s31 = smul.u32 0, 128
    %v32 = vstv %s31
    %v33 = vadd.s32 %v32, %v30
    %vm34 = vcmp.lt.s32.totalorder %v33, 16
    %v35 = vsub.f32 %v18, %v20
    %v36 = vsub.f32 %v19, %v21
    %v38 = vperm.slane %v22, 0
    %v40 = vmul.f32 %v35, %v38
    %v41 = vmul.f32 %v36, %v38
    %v42 = vsel %vm34, 1, 0
    %vm43 = vcmp.eq.s32.totalorder %v42, 1
    %v44 = vsel %vm43, %v40, 0.0
    %v45 = vsel %vm43, %v41, 0.0
    %vm46 = vcmask 80896
    %v48 = vsel %vm46, %v23, 0
    %v51 = vsel %vm46, %v24, 0
    %v54 = vsel %vm46, %v25, 0
    %v57 = vsel %vm46, %v26, 0
    %v60 = vsel %vm46, %v27, 0
    %v63 = vsel %vm46, %v28, 0
    %vm65 = vcmask 1041408
    %v67 = vsel %vm65, %v45, 0
    %69 = vmatpush.msra.mxu0 0.0
    %70 = vmatpush.msra.mxu0 0.0
    %71 = vmatpush.msra.mxu0 0.0
    %72 = vmatpush.msra.mxu0 0.0
    %73 = vmatpush.msra.mxu0 0.0
    %74 = vmatpush.msra.mxu0 0.0
    %75 = vmatpush.msra.mxu0 0.0
    %76 = vmatpush.msra.mxu0 0.0
    %77 = vmatpush.msra.mxu0 0.0
    %78 = vmatpush.msra.mxu0 0.0
    %79 = vmatpush.msra.mxu0 0.0
    %80 = vmatpush.msra.mxu0 0.0
    %81 = vmatpush.msra.mxu0 0.0
    %82 = vmatpush.msra.mxu0 0.0
    %v83 = vand.u32 %v67, 4294901760
    %84 = vmatpush.msra.mxu0 %v83
    %v85 = vand.u32 %v44, 4294901760
    %86 = vmatpush.msra.mxu0 %v85
    %v87 = vand.u32 %v48, 4294901760
    %v88 = vsub.f32 %v48, %v87
    %v89 = vand.u32 %v88, 4294901760
    %v90 = vsub.f32 %v88, %v89
    %v91 = vand.u32 %v90, 4294901760
    %92 = vmatmul.f32.gmra.mxu0 %v91
    %v93 = vpop.f32.mrf.mxu0
    %v94 = vadd.f32 0.0, %v93
    %v95 = vand.u32 %v51, 4294901760
    %v96 = vsub.f32 %v51, %v95
    %v97 = vand.u32 %v96, 4294901760
    %v98 = vsub.f32 %v96, %v97
    %v99 = vand.u32 %v98, 4294901760
    %100 = vmatmul.f32.gmra.mxu0 %v99
    %v101 = vpop.f32.mrf.mxu0
    %v102 = vadd.f32 0.0, %v101
    %v103 = vand.u32 %v54, 4294901760
    %v104 = vsub.f32 %v54, %v103
    %v105 = vand.u32 %v104, 4294901760
    %v106 = vsub.f32 %v104, %v105
    %v107 = vand.u32 %v106, 4294901760
    %108 = vmatmul.f32.gmra.mxu0 %v107
    %v109 = vpop.f32.mrf.mxu0
    %v110 = vadd.f32 0.0, %v109
    %v111 = vand.u32 %v57, 4294901760
    %v112 = vsub.f32 %v57, %v111
    %v113 = vand.u32 %v112, 4294901760
    %v114 = vsub.f32 %v112, %v113
    %v115 = vand.u32 %v114, 4294901760
    %116 = vmatmul.f32.gmra.mxu0 %v115
    %v117 = vpop.f32.mrf.mxu0
    %v118 = vadd.f32 0.0, %v117
    %v119 = vand.u32 %v60, 4294901760
    %v120 = vsub.f32 %v60, %v119
    %v121 = vand.u32 %v120, 4294901760
    %v122 = vsub.f32 %v120, %v121
    %v123 = vand.u32 %v122, 4294901760
    %124 = vmatmul.f32.gmra.mxu0 %v123
    %v125 = vpop.f32.mrf.mxu0
    %v126 = vadd.f32 0.0, %v125
    %v127 = vand.u32 %v63, 4294901760
    %v128 = vsub.f32 %v63, %v127
    %v129 = vand.u32 %v128, 4294901760
    %v130 = vsub.f32 %v128, %v129
    %v131 = vand.u32 %v130, 4294901760
    %132 = vmatmul.f32.gmra.mxu0 %v131
    %v133 = vpop.f32.mrf.mxu0
    %v134 = vadd.f32 0.0, %v133
    %135 = vdwg.mxu0
    %136 = vmatpush.msra.mxu0 0.0
    %137 = vmatpush.msra.mxu0 0.0
    %138 = vmatpush.msra.mxu0 0.0
    %139 = vmatpush.msra.mxu0 0.0
    %140 = vmatpush.msra.mxu0 0.0
    %141 = vmatpush.msra.mxu0 0.0
    %142 = vmatpush.msra.mxu0 0.0
    %143 = vmatpush.msra.mxu0 0.0
    %144 = vmatpush.msra.mxu0 0.0
    %145 = vmatpush.msra.mxu0 0.0
    %146 = vmatpush.msra.mxu0 0.0
    %147 = vmatpush.msra.mxu0 0.0
    %148 = vmatpush.msra.mxu0 0.0
    %149 = vmatpush.msra.mxu0 0.0
    %v150 = vand.u32 %v67, 4294901760
    %v151 = vsub.f32 %v67, %v150
    %v152 = vand.u32 %v151, 4294901760
    %v153 = vsub.f32 %v151, %v152
    %v154 = vand.u32 %v153, 4294901760
    %155 = vmatpush.msra.mxu0 %v154
    %v156 = vand.u32 %v44, 4294901760
    %v157 = vsub.f32 %v44, %v156
    %v158 = vand.u32 %v157, 4294901760
    %v159 = vsub.f32 %v157, %v158
    %v160 = vand.u32 %v159, 4294901760
    %161 = vmatpush.msra.mxu0 %v160
    %v162 = vand.u32 %v48, 4294901760
    %163 = vmatmul.f32.gmra.mxu0 %v162
    %v164 = vpop.f32.mrf.mxu0
    %v165 = vadd.f32 %v94, %v164
    %v166 = vand.u32 %v51, 4294901760
    %167 = vmatmul.f32.gmra.mxu0 %v166
    %v168 = vpop.f32.mrf.mxu0
    %v169 = vadd.f32 %v102, %v168
    %v170 = vand.u32 %v54, 4294901760
    %171 = vmatmul.f32.gmra.mxu0 %v170
    %v172 = vpop.f32.mrf.mxu0
    %v173 = vadd.f32 %v110, %v172
    %v174 = vand.u32 %v57, 4294901760
    %175 = vmatmul.f32.gmra.mxu0 %v174
    %v176 = vpop.f32.mrf.mxu0
    %v177 = vadd.f32 %v118, %v176
    %v178 = vand.u32 %v60, 4294901760
    %179 = vmatmul.f32.gmra.mxu0 %v178
    %v180 = vpop.f32.mrf.mxu0
    %v181 = vadd.f32 %v126, %v180
    %v182 = vand.u32 %v63, 4294901760
    %183 = vmatmul.f32.gmra.mxu0 %v182
    %v184 = vpop.f32.mrf.mxu0
    %v185 = vadd.f32 %v134, %v184
    %186 = vdwg.mxu0
    %187 = vmatpush.msra.mxu0 0.0
    %188 = vmatpush.msra.mxu0 0.0
    %189 = vmatpush.msra.mxu0 0.0
    %190 = vmatpush.msra.mxu0 0.0
    %191 = vmatpush.msra.mxu0 0.0
    %192 = vmatpush.msra.mxu0 0.0
    %193 = vmatpush.msra.mxu0 0.0
    %194 = vmatpush.msra.mxu0 0.0
    %195 = vmatpush.msra.mxu0 0.0
    %196 = vmatpush.msra.mxu0 0.0
    %197 = vmatpush.msra.mxu0 0.0
    %198 = vmatpush.msra.mxu0 0.0
    %199 = vmatpush.msra.mxu0 0.0
    %200 = vmatpush.msra.mxu0 0.0
    %v201 = vand.u32 %v67, 4294901760
    %v202 = vsub.f32 %v67, %v201
    %203 = vmatpush.msra.mxu0 %v202
    %v204 = vand.u32 %v44, 4294901760
    %v205 = vsub.f32 %v44, %v204
    %206 = vmatpush.msra.mxu0 %v205
    %v207 = vand.u32 %v48, 4294901760
    %v208 = vsub.f32 %v48, %v207
    %209 = vmatmul.f32.gmra.mxu0 %v208
    %v210 = vpop.f32.mrf.mxu0
    %v211 = vadd.f32 %v165, %v210
    %v212 = vand.u32 %v51, 4294901760
    %v213 = vsub.f32 %v51, %v212
    %214 = vmatmul.f32.gmra.mxu0 %v213
    %v215 = vpop.f32.mrf.mxu0
    %v216 = vadd.f32 %v169, %v215
    %v217 = vand.u32 %v54, 4294901760
    %v218 = vsub.f32 %v54, %v217
    %219 = vmatmul.f32.gmra.mxu0 %v218
    %v220 = vpop.f32.mrf.mxu0
    %v221 = vadd.f32 %v173, %v220
    %v222 = vand.u32 %v57, 4294901760
    %v223 = vsub.f32 %v57, %v222
    %224 = vmatmul.f32.gmra.mxu0 %v223
    %v225 = vpop.f32.mrf.mxu0
    %v226 = vadd.f32 %v177, %v225
    %v227 = vand.u32 %v60, 4294901760
    %v228 = vsub.f32 %v60, %v227
    %229 = vmatmul.f32.gmra.mxu0 %v228
    %v230 = vpop.f32.mrf.mxu0
    %v231 = vadd.f32 %v181, %v230
    %v232 = vand.u32 %v63, 4294901760
    %v233 = vsub.f32 %v63, %v232
    %234 = vmatmul.f32.gmra.mxu0 %v233
    %v235 = vpop.f32.mrf.mxu0
    %v236 = vadd.f32 %v185, %v235
    %237 = vdwg.mxu0
    %238 = vmatpush.msra.mxu0 0.0
    %239 = vmatpush.msra.mxu0 0.0
    %240 = vmatpush.msra.mxu0 0.0
    %241 = vmatpush.msra.mxu0 0.0
    %242 = vmatpush.msra.mxu0 0.0
    %243 = vmatpush.msra.mxu0 0.0
    %244 = vmatpush.msra.mxu0 0.0
    %245 = vmatpush.msra.mxu0 0.0
    %246 = vmatpush.msra.mxu0 0.0
    %247 = vmatpush.msra.mxu0 0.0
    %248 = vmatpush.msra.mxu0 0.0
    %249 = vmatpush.msra.mxu0 0.0
    %250 = vmatpush.msra.mxu0 0.0
    %251 = vmatpush.msra.mxu0 0.0
    %v252 = vand.u32 %v67, 4294901760
    %253 = vmatpush.msra.mxu0 %v252
    %v254 = vand.u32 %v44, 4294901760
    %255 = vmatpush.msra.mxu0 %v254
    %v256 = vand.u32 %v48, 4294901760
    %v257 = vsub.f32 %v48, %v256
    %v258 = vand.u32 %v257, 4294901760
    %259 = vmatmul.f32.gmra.mxu0 %v258
    %v260 = vpop.f32.mrf.mxu0
    %v261 = vadd.f32 %v211, %v260
    %v262 = vand.u32 %v51, 4294901760
    %v263 = vsub.f32 %v51, %v262
    %v264 = vand.u32 %v263, 4294901760
    %265 = vmatmul.f32.gmra.mxu0 %v264
    %v266 = vpop.f32.mrf.mxu0
    %v267 = vadd.f32 %v216, %v266
    %v268 = vand.u32 %v54, 4294901760
    %v269 = vsub.f32 %v54, %v268
    %v270 = vand.u32 %v269, 4294901760
    %271 = vmatmul.f32.gmra.mxu0 %v270
    %v272 = vpop.f32.mrf.mxu0
    %v273 = vadd.f32 %v221, %v272
    %v274 = vand.u32 %v57, 4294901760
    %v275 = vsub.f32 %v57, %v274
    %v276 = vand.u32 %v275, 4294901760
    %277 = vmatmul.f32.gmra.mxu0 %v276
    %v278 = vpop.f32.mrf.mxu0
    %v279 = vadd.f32 %v226, %v278
    %v280 = vand.u32 %v60, 4294901760
    %v281 = vsub.f32 %v60, %v280
    %v282 = vand.u32 %v281, 4294901760
    %283 = vmatmul.f32.gmra.mxu0 %v282
    %v284 = vpop.f32.mrf.mxu0
    %v285 = vadd.f32 %v231, %v284
    %v286 = vand.u32 %v63, 4294901760
    %v287 = vsub.f32 %v63, %v286
    %v288 = vand.u32 %v287, 4294901760
    %289 = vmatmul.f32.gmra.mxu0 %v288
    %v290 = vpop.f32.mrf.mxu0
    %v291 = vadd.f32 %v236, %v290
    %292 = vdwg.mxu0
    %293 = vmatpush.msra.mxu0 0.0
    %294 = vmatpush.msra.mxu0 0.0
    %295 = vmatpush.msra.mxu0 0.0
    %296 = vmatpush.msra.mxu0 0.0
    %297 = vmatpush.msra.mxu0 0.0
    %298 = vmatpush.msra.mxu0 0.0
    %299 = vmatpush.msra.mxu0 0.0
    %300 = vmatpush.msra.mxu0 0.0
    %301 = vmatpush.msra.mxu0 0.0
    %302 = vmatpush.msra.mxu0 0.0
    %303 = vmatpush.msra.mxu0 0.0
    %304 = vmatpush.msra.mxu0 0.0
    %305 = vmatpush.msra.mxu0 0.0
    %306 = vmatpush.msra.mxu0 0.0
    %v307 = vand.u32 %v67, 4294901760
    %v308 = vsub.f32 %v67, %v307
    %v309 = vand.u32 %v308, 4294901760
    %310 = vmatpush.msra.mxu0 %v309
    %v311 = vand.u32 %v44, 4294901760
    %v312 = vsub.f32 %v44, %v311
    %v313 = vand.u32 %v312, 4294901760
    %314 = vmatpush.msra.mxu0 %v313
    %v315 = vand.u32 %v48, 4294901760
    %316 = vmatmul.f32.gmra.mxu0 %v315
    %v317 = vpop.f32.mrf.mxu0
    %v318 = vadd.f32 %v261, %v317
    %v319 = vand.u32 %v51, 4294901760
    %320 = vmatmul.f32.gmra.mxu0 %v319
    %v321 = vpop.f32.mrf.mxu0
    %v322 = vadd.f32 %v267, %v321
    %v323 = vand.u32 %v54, 4294901760
    %324 = vmatmul.f32.gmra.mxu0 %v323
    %v325 = vpop.f32.mrf.mxu0
    %v326 = vadd.f32 %v273, %v325
    %v327 = vand.u32 %v57, 4294901760
    %328 = vmatmul.f32.gmra.mxu0 %v327
    %v329 = vpop.f32.mrf.mxu0
    %v330 = vadd.f32 %v279, %v329
    %v331 = vand.u32 %v60, 4294901760
    %332 = vmatmul.f32.gmra.mxu0 %v331
    %v333 = vpop.f32.mrf.mxu0
    %v334 = vadd.f32 %v285, %v333
    %v335 = vand.u32 %v63, 4294901760
    %336 = vmatmul.f32.gmra.mxu0 %v335
    %v337 = vpop.f32.mrf.mxu0
    %v338 = vadd.f32 %v291, %v337
    %339 = vdwg.mxu0
    %340 = vmatpush.msra.mxu0 0.0
    %341 = vmatpush.msra.mxu0 0.0
    %342 = vmatpush.msra.mxu0 0.0
    %343 = vmatpush.msra.mxu0 0.0
    %344 = vmatpush.msra.mxu0 0.0
    %345 = vmatpush.msra.mxu0 0.0
    %346 = vmatpush.msra.mxu0 0.0
    %347 = vmatpush.msra.mxu0 0.0
    %348 = vmatpush.msra.mxu0 0.0
    %349 = vmatpush.msra.mxu0 0.0
    %350 = vmatpush.msra.mxu0 0.0
    %351 = vmatpush.msra.mxu0 0.0
    %352 = vmatpush.msra.mxu0 0.0
    %353 = vmatpush.msra.mxu0 0.0
    %v354 = vand.u32 %v67, 4294901760
    %355 = vmatpush.msra.mxu0 %v354
    %v356 = vand.u32 %v44, 4294901760
    %357 = vmatpush.msra.mxu0 %v356
    %v358 = vand.u32 %v48, 4294901760
    %359 = vmatmul.f32.gmra.mxu0 %v358
    %v360 = vpop.f32.mrf.mxu0
    %v361 = vadd.f32 %v318, %v360
    %v362 = vand.u32 %v51, 4294901760
    %363 = vmatmul.f32.gmra.mxu0 %v362
    %v364 = vpop.f32.mrf.mxu0
    %v365 = vadd.f32 %v322, %v364
    %v366 = vand.u32 %v54, 4294901760
    %367 = vmatmul.f32.gmra.mxu0 %v366
    %v368 = vpop.f32.mrf.mxu0
    %v369 = vadd.f32 %v326, %v368
    %v370 = vand.u32 %v57, 4294901760
    %371 = vmatmul.f32.gmra.mxu0 %v370
    %v372 = vpop.f32.mrf.mxu0
    %v373 = vadd.f32 %v330, %v372
    %v374 = vand.u32 %v60, 4294901760
    %375 = vmatmul.f32.gmra.mxu0 %v374
    %v376 = vpop.f32.mrf.mxu0
    %v377 = vadd.f32 %v334, %v376
    %v378 = vand.u32 %v63, 4294901760
    %379 = vmatmul.f32.gmra.mxu0 %v378
    %v380 = vpop.f32.mrf.mxu0
    %v381 = vadd.f32 %v338, %v380
    %382 = vdwg.mxu0
    %v383 = vand.u32 2147483647, %v361
    %v384 = vand.u32 2147483647, %v365
    %v385 = vand.u32 2147483647, %v369
    %v386 = vand.u32 2147483647, %v373
    %v387 = vand.u32 2147483647, %v377
    %v388 = vand.u32 2147483647, %v381
    %vm389 = vcmp.lt.f32.partialorder %v383, 1.0
    %vm390 = vcmp.lt.f32.partialorder %v384, 1.0
    %vm391 = vcmp.lt.f32.partialorder %v385, 1.0
    %vm392 = vcmp.lt.f32.partialorder %v386, 1.0
    %vm393 = vcmp.lt.f32.partialorder %v387, 1.0
    %vm394 = vcmp.lt.f32.partialorder %v388, 1.0
    %v395 = vmul.f32 %v361, 0.5
    %v396 = vmul.f32 %v365, 0.5
    %v397 = vmul.f32 %v369, 0.5
    %v398 = vmul.f32 %v373, 0.5
    %v399 = vmul.f32 %v377, 0.5
    %v400 = vmul.f32 %v381, 0.5
    %v401 = vmul.f32 %v395, %v361
    %v402 = vmul.f32 %v396, %v365
    %v403 = vmul.f32 %v397, %v369
    %v404 = vmul.f32 %v398, %v373
    %v405 = vmul.f32 %v399, %v377
    %v406 = vmul.f32 %v400, %v381
    %v407 = vsub.f32 %v383, 0.5
    %v408 = vsub.f32 %v384, 0.5
    %v409 = vsub.f32 %v385, 0.5
    %v410 = vsub.f32 %v386, 0.5
    %v411 = vsub.f32 %v387, 0.5
    %v412 = vsub.f32 %v388, 0.5
    %v413 = vsel %vm389, %v401, %v407
    %v414 = vsel %vm390, %v402, %v408
    %v415 = vsel %vm391, %v403, %v409
    %v416 = vsel %vm392, %v404, %v410
    %v417 = vsel %vm393, %v405, %v411
    %v418 = vsel %vm394, %v406, %v412
    %v419 = vadd.f32 %v413, %v414
    %v420 = vadd.f32 %v419, %v415
    %v421 = vadd.f32 %v420, %v416
    %v422 = vadd.f32 %v421, %v417
    %v423 = vadd.f32 %v422, %v418
    %v424 = vrot.slane %v423, 4
    %v425 = vadd.f32 %v423, %v424
    %v426 = vrot.slane %v425, 2
    %v427 = vadd.f32 %v425, %v426
    %v428 = vrot.slane %v427, 1
    %v429 = vadd.f32 %v427, %v428
    %430 = vst [vmem:[#allocation2] sm:$0x1] %v429
    // Predicated region
    $region18: #{tpu_custom_call.1} parent=1 // pred_check
      _
    $region19: #{tpu_custom_call.1} parent=1 // pred_check_branch
      %432 = sbr.rel (0) target = $region21
    $region20: #{tpu_custom_call.1} parent=1 // pred_region
      %434 = vsyncadd [#allocation3], 0
      %s436 = sshll.u32 [#allocation2], 4
      %s437 = int_to_ptr.vmem [resolvable:$true] %s436
      %s438 = sshll.u32 %s4, 4
      %s439 = int_to_ptr.hbm [resolvable:$true] %s438
      %441 = dma.vmem_to_hbm [thread:$0]  %s437, 16, %s439, [#allocation3]
    $region21: #{tpu_custom_call.1} parent=1 // pred_fallthru
      _
    // Predicated region
    $region22: #{tpu_custom_call.1} parent=1 // pred_check
      _
    $region23: #{tpu_custom_call.1} parent=1 // pred_check_branch
      %443 = sbr.rel (0) target = $region25
    $region24: #{tpu_custom_call.1} parent=1 // pred_region
      %445 = dma.done [#allocation3], 16
    $region25: #{tpu_custom_call.1} parent=1 // pred_fallthru
      _
    %446 = vsyncpa [#allocation3], 1

</llo_original>
